<compile_context>
chip_gen: v5e
topology: v5e:2x2
jax: 0.10.0
libtpu: 0.0.40
codegen_flags: <defaults>
</compile_context>

<pallas_src>
import functools

import numpy as np
import jax
import jax.numpy as jnp
from jax.experimental import pallas as pl
from jax.experimental.pallas import tpu as pltpu


_LANE = 128
# f32 elements per (TB, L, TC) block: 256K elems = 1 MiB per block ->
# ~4 MiB of double-buffered in+out pipeline buffers + a few MiB of in-kernel
# temporaries, comfortably inside the default scoped-VMEM limit on v5e/v6e/v7x.
_BLOCK_ELEMS = 256 * 1024
# Keep aug_mean/aug_var fully VMEM-resident while N * TC stays below this.
_AUG_RESIDENT_ELEMS = 128 * 1024


def _largest_divisor_leq(n, cap):
    cap = int(max(1, min(n, cap)))
    for d in range(cap, 0, -1):
        if n % d == 0:
            return d
    return 1


def _style_randomization_kernel(x_ref, am_ref, av_ref, alpha_ref, o_ref, *,
                                eps, inv_l, inv_lm1, aug_resident):
    """One grid step == `TB` samples x one lane-dense channel tile.

    x_ref     : (TB, L, TC)        input dtype (f32/bf16), VMEM
    am_ref    : (NB or 1, TB, TC)  f32, VMEM  (resident or per-step block)
    av_ref    : (NB or 1, TB, TC)  f32, VMEM
    alpha_ref : (NB, TB, 1)        f32, VMEM  (always resident; tiny)
    o_ref     : (TB, L, TC)        output block
    """
    b = pl.program_id(1)                           # sample-block index (inner axis)

    x = x_ref[...].astype(jnp.float32)             # (TB, L, TC), f32 accumulation
    # Single-pass statistics over L (one read of the tile).
    s1 = jnp.sum(x, axis=1, keepdims=True)         # (TB, 1, TC)
    s2 = jnp.sum(x * x, axis=1, keepdims=True)     # (TB, 1, TC)
    mean = s1 * inv_l
    # Unbiased variance (torch.var default, ddof=1); clamp against cancellation.
    var = jnp.maximum(s2 - mean * s1, 0.0) * inv_lm1

    blk = b if aug_resident else 0                 # static Python choice
    am = am_ref[blk][:, None, :]                   # (TB, 1, TC)
    av = av_ref[blk][:, None, :]
    a = alpha_ref[b][:, :, None]                   # (TB, 1, 1)

    mean_mix = mean + a * (am - mean)              # (1-a)*mean + a*aug_mean
    var_mix = var + a * (av - var)                 # (1-a)*var  + a*aug_var

    # (x - mean)/sqrt(var+eps) * sqrt(var'+eps) + mean' fused into scale & shift.
    scale = jax.lax.rsqrt(var + eps) * jnp.sqrt(var_mix + eps)   # (TB, 1, TC)
    o_ref[...] = ((x - mean) * scale + mean_mix).astype(o_ref.dtype)


def style_randomization(x, aug_mean, aug_var, alpha, *, eps=1e-5):
    """Training-mode StyleRandomization forward.

    x        : (N, L, C)  f32 or bf16
    aug_mean : (N, C)     augmentation means
    aug_var  : (N, C)     augmentation variances
    alpha    : (N,)       per-sample mixing coefficient (torch.rand(N,1,1)/K),
                          passed explicitly for determinism.
    Returns (N, L, C) in x.dtype.  Requires L >= 2 (L == 1 gives NaN variance,
    matching torch's unbiased var).
    """
    N, L, C = x.shape
    am = jnp.asarray(aug_mean, jnp.float32).reshape(N, C)
    av = jnp.asarray(aug_var, jnp.float32).reshape(N, C)
    a2 = jnp.asarray(alpha, jnp.float32).reshape(N, 1)

    # Lane-dense channel dim: pad C up to a multiple of 128 so stores are full
    # `vst`s rather than masked partial stores.  Padded channels are all-zero
    # (mean=var=0, scale=1, out=0 -> no NaNs) and are sliced away afterwards.
    Cp = -(-C // _LANE) * _LANE
    if Cp != C:
        x_p = jnp.pad(x, ((0, 0), (0, 0), (0, Cp - C)))
        am = jnp.pad(am, ((0, 0), (0, Cp - C)))
        av = jnp.pad(av, ((0, 0), (0, Cp - C)))
    else:
        x_p = x

    # Tile sizes: biggest lane-dense channel tile, then pack samples per step
    # while the block stays under the VMEM element budget.
    m = Cp // _LANE
    tc = _LANE * _largest_divisor_leq(m, max(1, _BLOCK_ELEMS // (L * _LANE)))
    tb = _largest_divisor_leq(N, max(1, _BLOCK_ELEMS // (L * tc)))
    nb = N // tb
    grid = (Cp // tc, nb)            # sample axis innermost -> resident aug
                                     # stats are fetched at most once per C tile

    # Aug stats / alpha laid out as (NB, TB, ...) so the kernel only needs a
    # leading-axis index to pick its TB rows.
    am_r = am.reshape(nb, tb, Cp)
    av_r = av.reshape(nb, tb, Cp)
    a_r = a2.reshape(nb, tb, 1)

    aug_resident = (N * tc) <= _AUG_RESIDENT_ELEMS
    if aug_resident:
        aug_spec = pl.BlockSpec((nb, tb, tc), lambda c, b: (0, 0, c))
    else:  # very large N: fall back to a small per-step tile
        aug_spec = pl.BlockSpec((1, tb, tc), lambda c, b: (b, 0, c))
    alpha_spec = pl.BlockSpec((nb, tb, 1), lambda c, b: (0, 0, 0))

    inv_l = 1.0 / L
    inv_lm1 = 1.0 / (L - 1) if L > 1 else float("nan")   # torch: NaN for L == 1

    elt = x.dtype.itemsize
    cost = pl.CostEstimate(
        flops=8 * N * L * Cp,
        transcendentals=2 * N * Cp,
        bytes_accessed=2 * N * L * Cp * elt + 3 * N * Cp * 4,
    )

    out = pl.pallas_call(
        functools.partial(
            _style_randomization_kernel,
            eps=float(eps), inv_l=inv_l, inv_lm1=inv_lm1,
            aug_resident=aug_resident),
        out_shape=jax.ShapeDtypeStruct((N, L, Cp), x.dtype),
        grid=grid,
        in_specs=[
            pl.BlockSpec((tb, L, tc), lambda c, b: (b, 0, c)),   # x slab
            aug_spec,                                            # aug_mean
            aug_spec,                                            # aug_var
            alpha_spec,                                          # alpha
        ],
        out_specs=pl.BlockSpec((tb, L, tc), lambda c, b: (b, 0, c)),
        compiler_params=pltpu.CompilerParams(
            dimension_semantics=("parallel", "parallel"),
            vmem_limit_bytes=32 * 1024 * 1024),
        cost_estimate=cost,
    )(x_p, am_r, av_r, a_r)

    return out[:, :, :C] if Cp != C else out


def reference_forward(x, aug_mean, aug_var, alpha, *, eps=1e-5):
    """Pure-JAX mirror of the PyTorch training-mode forward."""
    xt = jnp.transpose(x, (0, 2, 1))                 # (N, C, L)
    mean = jnp.mean(xt, axis=-1, keepdims=True)      # (N, C, 1)
    var = jnp.var(xt, axis=-1, ddof=1, keepdims=True)
    xh = (xt - mean) / jnp.sqrt(var + eps)
    a = alpha[:, None, None]
    mean = (1.0 - a) * mean + a * aug_mean[:, :, None]
    var = (1.0 - a) * var + a * aug_var[:, :, None]
    y = xh * jnp.sqrt(var + eps) + mean
    return jnp.transpose(y, (0, 2, 1))               # (N, L, C)


if __name__ == "__main__":
    # Shape consistent with the module's (N, L, C) input.
    N, L, C, K = 2, 16, 4, 1

    key = jax.random.PRNGKey(0)
    kx, km, kv, ka, kx2, km2, kv2, ka2 = jax.random.split(key, 8)
    x = jax.random.normal(kx, (N, L, C), jnp.float32) * 2.0 + 0.5
    aug_mean = jax.random.normal(km, (N, C), jnp.float32)
    aug_var = jax.random.uniform(kv, (N, C), jnp.float32, 0.5, 1.5)
    # alpha = torch.rand(N,1,1)/K in the original; generated host-side (deterministic)
    alpha = jax.random.uniform(ka, (N,), jnp.float32) / K

    y = jax.block_until_ready(style_randomization(x, aug_mean, aug_var, alpha))
    assert y.shape == (N, L, C), y.shape
    np.testing.assert_allclose(np.asarray(y),
                               np.asarray(reference_forward(x, aug_mean, aug_var, alpha)),
                               rtol=1e-4, atol=1e-4)

    # Second shape: C not a multiple of 128 (pad path) and an odd batch size.
    N2, L2, C2 = 3, 8, 132
    x2 = jax.random.normal(kx2, (N2, L2, C2), jnp.float32) + 1.0
    m2 = jax.random.normal(km2, (N2, C2), jnp.float32)
    v2 = jax.random.uniform(kv2, (N2, C2), jnp.float32, 0.5, 1.5)
    a2 = jax.random.uniform(ka2, (N2,), jnp.float32)
    y2 = jax.block_until_ready(style_randomization(x2, m2, v2, a2))
    np.testing.assert_allclose(np.asarray(y2),
                               np.asarray(reference_forward(x2, m2, v2, a2)),
                               rtol=1e-4, atol=1e-4)

    print("KERNEL_OK")
</pallas_src>

<mosaic_0001>
module attributes {stable_mosaic.version = 11 : i64} {
  func.func @_style_randomization_kernel(%arg0: i32, %arg1: i32, %arg2: memref<2x16x128xf32, #tpu.memory_space<vmem>>, %arg3: memref<1x2x128xf32, #tpu.memory_space<vmem>>, %arg4: memref<1x2x128xf32, #tpu.memory_space<vmem>>, %arg5: memref<1x2x1xf32, #tpu.memory_space<vmem>>, %arg6: memref<2x16x128xf32, #tpu.memory_space<vmem>>) attributes {dimension_semantics = [#tpu.dimension_semantics<parallel>, #tpu.dimension_semantics<parallel>], iteration_bounds = array<i64: 1, 1>, scalar_prefetch = 0 : i64, scratch_operands = 0 : i64, tpu.core_type = #tpu.core_type<tc>, window_params = [{transform_indices = @transform_0, window_bounds = array<i64: 2, 16, 128>}, {transform_indices = @transform_1, window_bounds = array<i64: 1, 2, 128>}, {transform_indices = @transform_2, window_bounds = array<i64: 1, 2, 128>}, {pipeline_mode = #tpu.pipeline_mode<synchronous>, transform_indices = @transform_3, window_bounds = array<i64: 1, 2, 1>}, {transform_indices = @transform_4, window_bounds = array<i64: 2, 16, 128>}]} {
    %c0 = arith.constant 0 : index
    %c0_0 = arith.constant 0 : index
    %c0_1 = arith.constant 0 : index
    %0 = vector.load %arg2[%c0, %c0_0, %c0_1] : memref<2x16x128xf32, #tpu.memory_space<vmem>>, vector<2x16x128xf32>
    %cst = arith.constant dense<0.000000e+00> : vector<2x128xf32>
    %1 = vector.multi_reduction <add>, %0, %cst [1] : vector<2x16x128xf32> to vector<2x128xf32>
    %2 = vector.shape_cast %1 : vector<2x128xf32> to vector<2x1x128xf32>
    %3 = arith.mulf %0, %0 : vector<2x16x128xf32>
    %cst_2 = arith.constant dense<0.000000e+00> : vector<2x128xf32>
    %4 = vector.multi_reduction <add>, %3, %cst_2 [1] : vector<2x16x128xf32> to vector<2x128xf32>
    %5 = vector.shape_cast %4 : vector<2x128xf32> to vector<2x1x128xf32>
    %cst_3 = arith.constant 6.250000e-02 : f32
    %6 = vector.broadcast %cst_3 : f32 to vector<2x1x128xf32>
    %7 = arith.mulf %2, %6 : vector<2x1x128xf32>
    %8 = arith.mulf %7, %2 : vector<2x1x128xf32>
    %9 = arith.subf %5, %8 : vector<2x1x128xf32>
    %cst_4 = arith.constant 0.000000e+00 : f32
    %10 = vector.broadcast %cst_4 : f32 to vector<2x1x128xf32>
    %11 = arith.maximumf %9, %10 : vector<2x1x128xf32>
    %cst_5 = arith.constant 0.0666666701 : f32
    %12 = vector.broadcast %cst_5 : f32 to vector<2x1x128xf32>
    %13 = arith.mulf %11, %12 : vector<2x1x128xf32>
    %14 = arith.index_cast %arg1 : i32 to index
    %c0_6 = arith.constant 0 : index
    %c0_7 = arith.constant 0 : index
    %15 = vector.load %arg3[%14, %c0_6, %c0_7] : memref<1x2x128xf32, #tpu.memory_space<vmem>>, vector<1x2x128xf32>
    %16 = vector.shape_cast %15 : vector<1x2x128xf32> to vector<2x128xf32>
    %17 = vector.shape_cast %16 : vector<2x128xf32> to vector<2x1x128xf32>
    %18 = arith.index_cast %arg1 : i32 to index
    %c0_8 = arith.constant 0 : index
    %c0_9 = arith.constant 0 : index
    %19 = vector.load %arg4[%18, %c0_8, %c0_9] : memref<1x2x128xf32, #tpu.memory_space<vmem>>, vector<1x2x128xf32>
    %20 = vector.shape_cast %19 : vector<1x2x128xf32> to vector<2x128xf32>
    %21 = vector.shape_cast %20 : vector<2x128xf32> to vector<2x1x128xf32>
    %22 = arith.index_cast %arg1 : i32 to index
    %c0_10 = arith.constant 0 : index
    %c0_11 = arith.constant 0 : index
    %23 = vector.load %arg5[%22, %c0_10, %c0_11] : memref<1x2x1xf32, #tpu.memory_space<vmem>>, vector<1x2x1xf32>
    %24 = vector.shape_cast %23 : vector<1x2x1xf32> to vector<2x1xf32>
    %25 = vector.shape_cast %24 : vector<2x1xf32> to vector<2x1x1xf32>
    %26 = arith.subf %17, %7 : vector<2x1x128xf32>
    %27 = vector.broadcast %25 : vector<2x1x1xf32> to vector<2x1x128xf32>
    %28 = arith.mulf %27, %26 : vector<2x1x128xf32>
    %29 = arith.addf %7, %28 : vector<2x1x128xf32>
    %30 = arith.subf %21, %13 : vector<2x1x128xf32>
    %31 = vector.broadcast %25 : vector<2x1x1xf32> to vector<2x1x128xf32>
    %32 = arith.mulf %31, %30 : vector<2x1x128xf32>
    %33 = arith.addf %13, %32 : vector<2x1x128xf32>
    %cst_12 = arith.constant 9.99999974E-6 : f32
    %34 = vector.broadcast %cst_12 : f32 to vector<2x1x128xf32>
    %35 = arith.addf %13, %34 : vector<2x1x128xf32>
    %36 = math.rsqrt %35 : vector<2x1x128xf32>
    %cst_13 = arith.constant 9.99999974E-6 : f32
    %37 = vector.broadcast %cst_13 : f32 to vector<2x1x128xf32>
    %38 = arith.addf %33, %37 : vector<2x1x128xf32>
    %39 = math.sqrt %38 : vector<2x1x128xf32>
    %40 = arith.mulf %36, %39 : vector<2x1x128xf32>
    %41 = vector.broadcast %7 : vector<2x1x128xf32> to vector<2x16x128xf32>
    %42 = arith.subf %0, %41 : vector<2x16x128xf32>
    %43 = vector.broadcast %40 : vector<2x1x128xf32> to vector<2x16x128xf32>
    %44 = arith.mulf %42, %43 : vector<2x16x128xf32>
    %45 = vector.broadcast %29 : vector<2x1x128xf32> to vector<2x16x128xf32>
    %46 = arith.addf %44, %45 : vector<2x16x128xf32>
    %c0_14 = arith.constant 0 : index
    %c0_15 = arith.constant 0 : index
    %c0_16 = arith.constant 0 : index
    %47 = vector.load %arg6[%c0_14, %c0_15, %c0_16] : memref<2x16x128xf32, #tpu.memory_space<vmem>>, vector<2x16x128xf32>
    tpu.vector_store %arg6[%c0_14, %c0_15, %c0_16], %46 {strides = array<i32>} : memref<2x16x128xf32, #tpu.memory_space<vmem>>, vector<2x16x128xf32>,
    return
  }
  func.func @transform_0(%arg0: i32, %arg1: i32) -> (i32, i32, i32) {
    %c0_i32 = arith.constant 0 : i32
    %c0_i32_0 = arith.constant 0 : i32
    return %arg1, %c0_i32, %arg0 : i32, i32, i32
  }
  func.func @transform_1(%arg0: i32, %arg1: i32) -> (i32, i32, i32) {
    %c0_i32 = arith.constant 0 : i32
    %c0_i32_0 = arith.constant 0 : i32
    %c0_i32_1 = arith.constant 0 : i32
    return %c0_i32, %c0_i32_0, %arg0 : i32, i32, i32
  }
  func.func @transform_2(%arg0: i32, %arg1: i32) -> (i32, i32, i32) {
    %c0_i32 = arith.constant 0 : i32
    %c0_i32_0 = arith.constant 0 : i32
    %c0_i32_1 = arith.constant 0 : i32
    return %c0_i32, %c0_i32_0, %arg0 : i32, i32, i32
  }
  func.func @transform_3(%arg0: i32, %arg1: i32) -> (i32, i32, i32) {
    %c0_i32 = arith.constant 0 : i32
    %c0_i32_0 = arith.constant 0 : i32
    %c0_i32_1 = arith.constant 0 : i32
    %c0_i32_2 = arith.constant 0 : i32
    return %c0_i32, %c0_i32_0, %c0_i32_1 : i32, i32, i32
  }
  func.func @transform_4(%arg0: i32, %arg1: i32) -> (i32, i32, i32) {
    %c0_i32 = arith.constant 0 : i32
    %c0_i32_0 = arith.constant 0 : i32
    return %arg1, %c0_i32, %arg0 : i32, i32, i32
  }
}

</mosaic_0001>

<llo_original>
// kernel: tpu_custom_call.1
$region0: #{tpu_custom_call.1}
  #allocation0 [shape = 'u32[]', space=smem, size = 0x4, offset = 0x4, fixed_abs, tag = 'smem constant byte address 0x4 - core index']
  #allocation1 [shape = 'u32[72,128]{1,0:T(1,128)}', space=vmem, size = 0x9000, scoped, tag = 'internal scratch']
  %s0 = inlined_call_operand.hbm [shape: f32[2,16,128], index: 0, kind: input, shape index: {}]
  %s1 = inlined_call_operand.vmem [shape: f32[1,2,128], index: 1, kind: input, shape index: {}]
  %s2 = inlined_call_operand.vmem [shape: f32[1,2,128], index: 2, kind: input, shape index: {}]
  %s3 = inlined_call_operand.vmem [shape: f32[1,2,1], index: 3, kind: input, shape index: {}]
  %s4 = inlined_call_operand.hbm [shape: f32[2,16,128], index: 4, kind: output, shape index: {}]
  %s5 = sld [smem:[#allocation0]]
  $region30: #{tpu_custom_call.1} parent=0
    _
  %s7 = ssub.s32 1, %s5
  %s8 = scalar_select 0, %s7, %s5
  $region1: #{tpu_custom_call.1} parent=0
    #allocation2 [shape = 'u8[16384]{0}', space=vmem, size = 0x4000, scoped, tag = 'input window, operand 0, single buffered']
    #allocation3 [shape = 's32[1]{0}', space=sflag, size = 0x4, scoped, tag = 'scoped memory for tpu_custom_call.1']
    #allocation4 [shape = 's32[1]{0}', space=sflag, size = 0x4, scoped, tag = 'scoped memory for tpu_custom_call.1']
    #allocation5 [shape = 'u8[16384]{0}', space=vmem, size = 0x4000, scoped, tag = 'output window, operand 0, single buffered']
    %9 = vsyncpa [#allocation3], 0
    %10 = vsyncpa [#allocation4], 0
    // Predicated region
    $region2: #{tpu_custom_call.1} parent=1 // pred_check
      _
    $region3: #{tpu_custom_call.1} parent=1 // pred_check_branch
      %12 = sbr.rel (0) target = $region5
    $region4: #{tpu_custom_call.1} parent=1 // pred_region
      %14 = vsyncadd [#allocation3], 0
      %s15 = sshll.u32 %s0, 4
      %s16 = int_to_ptr.hbm [resolvable:$true] %s15
      %s17 = sshll.u32 [#allocation2], 4
      %s18 = int_to_ptr.vmem [resolvable:$true] %s17
      %23 = dma.hbm_to_vmem [thread:$0]  %s16, 512, %s18, [#allocation3], 128, 128, 8
    $region5: #{tpu_custom_call.1} parent=1 // pred_fallthru
      _
    // Predicated region
    $region6: #{tpu_custom_call.1} parent=1 // pred_check
      _
    $region7: #{tpu_custom_call.1} parent=1 // pred_check_branch
      %25 = sbr.rel (0) target = $region9
    $region8: #{tpu_custom_call.1} parent=1 // pred_region
      _
    $region9: #{tpu_custom_call.1} parent=1 // pred_fallthru
      _
    // Predicated region
    $region10: #{tpu_custom_call.1} parent=1 // pred_check
      _
    $region11: #{tpu_custom_call.1} parent=1 // pred_check_branch
      %27 = sbr.rel (0) target = $region13
    $region12: #{tpu_custom_call.1} parent=1 // pred_region
      _
    $region13: #{tpu_custom_call.1} parent=1 // pred_fallthru
      _
    // Predicated region
    $region14: #{tpu_custom_call.1} parent=1 // pred_check
      _
    $region15: #{tpu_custom_call.1} parent=1 // pred_check_branch
      %29 = sbr.rel (0) target = $region17
    $region16: #{tpu_custom_call.1} parent=1 // pred_region
      _
    $region17: #{tpu_custom_call.1} parent=1 // pred_fallthru
      _
    // Predicated region
    $region18: #{tpu_custom_call.1} parent=1 // pred_check
      _
    $region19: #{tpu_custom_call.1} parent=1 // pred_check_branch
      %31 = sbr.rel (0) target = $region21
    $region20: #{tpu_custom_call.1} parent=1 // pred_region
      %33 = dma.done [#allocation3], 512
    $region21: #{tpu_custom_call.1} parent=1 // pred_fallthru
      _
    %v34 = vld [vmem:[#allocation2] sm:$0xff]
    %v35 = vld [vmem:[#allocation2 + $0x8] sm:$0xff]
    %v36 = vld [vmem:[#allocation2 + $0x10] sm:$0xff]
    %v37 = vld [vmem:[#allocation2 + $0x18] sm:$0xff]
    %v38 = vadd.f32 %v34, %v35
    %v39 = vrot.slane %v38, 4
    %v40 = vadd.f32 %v38, %v39
    %v41 = vrot.slane %v40, 2
    %v42 = vadd.f32 %v40, %v41
    %v43 = vrot.slane %v42, 1
    %v44 = vadd.f32 %v42, %v43
    %v45 = vadd.f32 %v36, %v37
    %v46 = vrot.slane %v45, 4
    %v47 = vadd.f32 %v45, %v46
    %v48 = vrot.slane %v47, 2
    %v49 = vadd.f32 %v47, %v48
    %v50 = vrot.slane %v49, 1
    %v51 = vadd.f32 %v49, %v50
    %v52 = vmul.f32 %v34, %v34
    %v53 = vmul.f32 %v35, %v35
    %v54 = vmul.f32 %v36, %v36
    %v55 = vmul.f32 %v37, %v37
    %v56 = vadd.f32 %v52, %v53
    %v57 = vrot.slane %v56, 4
    %v58 = vadd.f32 %v56, %v57
    %v59 = vrot.slane %v58, 2
    %v60 = vadd.f32 %v58, %v59
    %v61 = vrot.slane %v60, 1
    %v62 = vadd.f32 %v60, %v61
    %v63 = vadd.f32 %v54, %v55
    %v64 = vrot.slane %v63, 4
    %v65 = vadd.f32 %v63, %v64
    %v66 = vrot.slane %v65, 2
    %v67 = vadd.f32 %v65, %v66
    %v68 = vrot.slane %v67, 1
    %v69 = vadd.f32 %v67, %v68
    %v70 = vmul.f32 %v44, 0.0625
    %v71 = vmul.f32 %v51, 0.0625
    %v72 = vmul.f32 %v70, %v44
    %v73 = vmul.f32 %v71, %v51
    %v74 = vsub.f32 %v62, %v72
    %v75 = vsub.f32 %v69, %v73
    %v76 = vmax.f32 %v74, 0.0
    %v77 = vmax.f32 %v75, 0.0
    %v78 = vmul.f32 %v76, 0.06666667
    %v79 = vmul.f32 %v77, 0.06666667
    %s80 = smul.u32 0, 2
    %s81 = scalar_lea.vmem %s1, %s80
    %v82 = vld [vmem:[%s81] sm:$0x3]
    %v84 = vrot.slane %v82, 1
    %s86 = scalar_lea.vmem %s2, %s80
    %v87 = vld [vmem:[%s86] sm:$0x3]
    %v89 = vrot.slane %v87, 1
    %s91 = scalar_lea.vmem %s3, %s80
    %v92 = vld [vmem:[%s91] sm:$0x3]
    %v94 = vrot.slane %v92, 1
    %v95 = vsub.f32 %v82, %v70
    %v96 = vsub.f32 %v84, %v71
    %97 = vset.pattern.permute.xlu0 0
    %98 = vperm.xlu0 %97, %v92
    %v99 = vpop.permute.xlu0 %98
    %v101 = vperm.slane %v99, 0
    %102 = vset.pattern.permute.xlu0 0
    %103 = vperm.xlu0 %102, %v94
    %v104 = vpop.permute.xlu0 %103
    %v106 = vperm.slane %v104, 0
    %v107 = vmul.f32 %v101, %v95
    %v108 = vmul.f32 %v106, %v96
    %v109 = vadd.f32 %v70, %v107
    %v110 = vadd.f32 %v71, %v108
    %v111 = vsub.f32 %v87, %v78
    %v112 = vsub.f32 %v89, %v79
    %v113 = vmul.f32 %v101, %v111
    %v114 = vmul.f32 %v106, %v112
    %v115 = vadd.f32 %v78, %v113
    %v116 = vadd.f32 %v79, %v114
    %v117 = vadd.f32 %v78, 1e-05
    %v118 = vadd.f32 %v79, 1e-05
    %v119 = vrsqrt.pop %v117
    %v120 = vmul.f32 %v119, %v117
    %v121 = vmul.f32 %v120, %v119
    %v122 = vmul.f32 0.5, %v121
    %v123 = vsub.f32 1.5, %v122
    %v124 = vmul.f32 %v119, %v123
    %vm125 = vweird.f32 %v117
    %vm126 = vweird.f32 %v119
    %vm127 = vmor %vm125, %vm126
    %v128 = vsel %vm127, %v119, %v124
    %v129 = vrsqrt.pop %v118
    %v130 = vmul.f32 %v129, %v118
    %v131 = vmul.f32 %v130, %v129
    %v132 = vmul.f32 0.5, %v131
    %v133 = vsub.f32 1.5, %v132
    %v134 = vmul.f32 %v129, %v133
    %vm135 = vweird.f32 %v118
    %vm136 = vweird.f32 %v129
    %vm137 = vmor %vm135, %vm136
    %v138 = vsel %vm137, %v129, %v134
    %v139 = vadd.f32 %v115, 1e-05
    %v140 = vadd.f32 %v116, 1e-05
    %v141 = vrsqrt.pop %v139
    %v142 = vmul.f32 %v141, %v139
    %v143 = vmul.f32 %v142, %v141
    %v144 = vmul.f32 0.5, %v143
    %v145 = vsub.f32 1.5, %v144
    %v146 = vmul.f32 %v141, %v145
    %v147 = vmul.f32 %v139, %v146
    %vm148 = vcmp.eq.f32.partialorder %v139, inf
    %v149 = vsel %vm148, %v139, %v147
    %vm150 = vcmp.eq.f32.partialorder %v139, 0.0
    %v151 = vand.u32 %v139, 2147483648
    %v152 = vsel %vm150, %v151, %v149
    %v153 = vrsqrt.pop %v140
    %v154 = vmul.f32 %v153, %v140
    %v155 = vmul.f32 %v154, %v153
    %v156 = vmul.f32 0.5, %v155
    %v157 = vsub.f32 1.5, %v156
    %v158 = vmul.f32 %v153, %v157
    %v159 = vmul.f32 %v140, %v158
    %vm160 = vcmp.eq.f32.partialorder %v140, inf
    %v161 = vsel %vm160, %v140, %v159
    %vm162 = vcmp.eq.f32.partialorder %v140, 0.0
    %v163 = vand.u32 %v140, 2147483648
    %v164 = vsel %vm162, %v163, %v161
    %v165 = vmul.f32 %v128, %v152
    %v166 = vmul.f32 %v138, %v164
    %v167 = vsub.f32 %v34, %v70
    %v168 = vsub.f32 %v35, %v70
    %v169 = vsub.f32 %v36, %v71
    %v170 = vsub.f32 %v37, %v71
    %v171 = vperm.slane %v165, 0
    %v172 = vperm.slane %v166, 0
    %v173 = vmul.f32 %v167, %v171
    %v174 = vmul.f32 %v168, %v171
    %v175 = vmul.f32 %v169, %v172
    %v176 = vmul.f32 %v170, %v172
    %v177 = vperm.slane %v109, 0
    %v178 = vperm.slane %v110, 0
    %v179 = vadd.f32 %v173, %v177
    %v180 = vadd.f32 %v174, %v177
    %v181 = vadd.f32 %v175, %v178
    %v182 = vadd.f32 %v176, %v178
    %183 = vst [vmem:[#allocation5] sm:$0xff] %v179
    %184 = vst [vmem:[#allocation5 + $0x8] sm:$0xff] %v180
    %185 = vst [vmem:[#allocation5 + $0x10] sm:$0xff] %v181
    %186 = vst [vmem:[#allocation5 + $0x18] sm:$0xff] %v182
    // Predicated region
    $region22: #{tpu_custom_call.1} parent=1 // pred_check
      _
    $region23: #{tpu_custom_call.1} parent=1 // pred_check_branch
      %188 = sbr.rel (0) target = $region25
    $region24: #{tpu_custom_call.1} parent=1 // pred_region
      %190 = vsyncadd [#allocation4], 0
      %s191 = sshll.u32 [#allocation5], 4
      %s192 = int_to_ptr.vmem [resolvable:$true] %s191
      %s193 = sshll.u32 %s4, 4
      %s194 = int_to_ptr.hbm [resolvable:$true] %s193
      %199 = dma.vmem_to_hbm [thread:$0]  %s192, 512, %s194, [#allocation4], 128, 128, 8
    $region25: #{tpu_custom_call.1} parent=1 // pred_fallthru
      _
    // Predicated region
    $region26: #{tpu_custom_call.1} parent=1 // pred_check
      _
    $region27: #{tpu_custom_call.1} parent=1 // pred_check_branch
      %201 = sbr.rel (0) target = $region29
    $region28: #{tpu_custom_call.1} parent=1 // pred_region
      %203 = dma.done [#allocation4], 512
    $region29: #{tpu_custom_call.1} parent=1 // pred_fallthru
      _
    %204 = vsyncpa [#allocation3], 1
    %205 = vsyncpa [#allocation4], 1

</llo_original>
